<compile_context>
chip_gen: v6e
topology: v6e:2x2x1
jax: 0.10.0
libtpu: 0.0.40
codegen_flags: <defaults>
</compile_context>

<pallas_src>
import jax
import jax.numpy as jnp
from jax.experimental import pallas as pl
from jax.experimental.pallas import tpu as pltpu


def gru_cell_kernel(x_ref, h_ref, whh_ref, rows_ref, blin_ref, hout_ref, pred_ref):
    H = h_ref.shape[1]
    gate_pad = whh_ref.shape[1] // 3      # lanes per gate slot (>= H, multiple of 128)

    x = x_ref[...]              # (B, 1)
    h = h_ref[...]              # (B, H)

    # Single vreg-sized load of all row-vector params; static sublane slices are free.
    rows = rows_ref[...]        # (8, H)
    wir = rows[0:1, :]
    wiz = rows[1:2, :]
    win = rows[2:3, :]
    b_r = rows[3:4, :]          # pre-summed b_ir + b_hr
    b_z = rows[4:5, :]          # pre-summed b_iz + b_hz
    b_in = rows[5:6, :]
    b_hn = rows[6:7, :]
    wlin = rows[7:8, :]

    # Input path (input_size == 1): broadcast multiply on the VPU, no K=1 MXU matmul.
    gi_r = x * wir              # (B,1) * (1,H) -> (B,H)
    gi_z = x * wiz
    gi_n = x * win

    # Hidden path: one fused (B,H)@(H,3*gate_pad) MXU matmul against the
    # gate-padded weight; each gate's result starts on a 128-lane vreg boundary.
    gh = jnp.dot(h, whh_ref[...], preferred_element_type=jnp.float32)  # (B, 3*gate_pad)
    gh_r = gh[:, 0:H]
    gh_z = gh[:, gate_pad:gate_pad + H]
    gh_n = gh[:, 2 * gate_pad:2 * gate_pad + H]

    # PyTorch GRU cell (gate order: reset, update, new).
    r = jax.nn.sigmoid(gi_r + gh_r + b_r)
    z = jax.nn.sigmoid(gi_z + gh_z + b_z)
    n = jnp.tanh(gi_n + b_in + r * (gh_n + b_hn))
    h_new = (1.0 - z) * n + z * h
    hout_ref[...] = h_new

    # Linear head (output_size == 1): VPU multiply + cross-lane (XLU) reduction;
    # scalar bias comes from SMEM.
    pred_ref[...] = (jnp.sum(h_new * wlin, axis=-1, keepdims=True)
                     + blin_ref[0, 0])


def prepare_params(w_ih, w_hh, b_ih, b_hh, w_lin, b_lin):
    """One-time re-layout of PyTorch-layout parameters for the kernel.

    w_ih (3H, I), w_hh (3H, H), b_ih (3H,), b_hh (3H,), w_lin (O, H), b_lin (O,).
    PyTorch gate order along the 3H axis: [reset | update | new].

    Returns:
      whh_packed : (H, 3*gate_pad) f32 -- per-gate W_h*^T, each gate lane-padded
                   to its own gate_pad-lane slot (gate_pad = multiple of 128 >= H).
      rows       : (8, H) f32 -- [wir, wiz, win, b_r, b_z, b_in, b_hn, wlin_row].
      blin       : (1, 1) f32 -- linear-head bias (lives in SMEM inside the kernel).
    """
    H = w_hh.shape[1]
    assert w_ih.shape[1] == 1, "kernel input path assumes input_size == 1"
    assert w_lin.shape[0] == 1, "kernel linear head assumes output_size == 1"

    gate_pad = ((H + 127) // 128) * 128

    def gate_block(g):
        wt = jnp.transpose(w_hh[g * H:(g + 1) * H])            # (H, H) (in, out)
        return jnp.pad(wt, ((0, 0), (0, gate_pad - H)))        # (H, gate_pad)

    whh_packed = jnp.concatenate(
        [gate_block(0), gate_block(1), gate_block(2)], axis=1)  # (H, 3*gate_pad)

    rows = jnp.stack(
        [
            w_ih[0:H, 0],                      # wir  (transposed (1,H) row)
            w_ih[H:2 * H, 0],                  # wiz
            w_ih[2 * H:3 * H, 0],              # win
            b_ih[0:H] + b_hh[0:H],             # b_r (pre-summed)
            b_ih[H:2 * H] + b_hh[H:2 * H],     # b_z (pre-summed)
            b_ih[2 * H:3 * H],                 # b_in (must stay outside r*(...))
            b_hh[2 * H:3 * H],                 # b_hn (must stay inside r*(...))
            w_lin[0],                          # linear-head row
        ],
        axis=0,
    ).astype(jnp.float32)                      # (8, H)

    blin = b_lin.reshape(1, 1).astype(jnp.float32)
    return whh_packed.astype(jnp.float32), rows, blin


def _gru_forward(x, h0, params):
    whh_packed, rows, blin = params
    B, I = x.shape
    H = h0.shape[1]
    G3 = whh_packed.shape[1]
    O = blin.shape[1]

    def vmem_spec(shape):
        return pl.BlockSpec(shape, lambda: tuple(0 for _ in shape))

    hout, pred = pl.pallas_call(
        gru_cell_kernel,
        grid=(),
        in_specs=[
            vmem_spec((B, I)),                                    # x
            vmem_spec((B, H)),                                    # h0
            vmem_spec((H, G3)),                                   # fused hidden weights
            vmem_spec((8, H)),                                    # packed row params
            pl.BlockSpec(memory_space=pltpu.MemorySpace.SMEM),    # blin scalar
        ],
        out_specs=[
            vmem_spec((B, H)),
            vmem_spec((B, O)),
        ],
        out_shape=[
            jax.ShapeDtypeStruct((B, H), jnp.float32),
            jax.ShapeDtypeStruct((B, O), jnp.float32),
        ],
    )(x, h0, whh_packed, rows, blin)
    return hout, pred


gru_forward = jax.jit(_gru_forward)


def init_params(key, input_size, hidden_size, output_size):
    """Deterministic init mimicking PyTorch uniform(-1/sqrt(H), 1/sqrt(H))."""
    k = 1.0 / jnp.sqrt(jnp.float32(hidden_size))
    keys = jax.random.split(key, 6)
    w_ih = jax.random.uniform(keys[0], (3 * hidden_size, input_size),
                              jnp.float32, -k, k)
    w_hh = jax.random.uniform(keys[1], (3 * hidden_size, hidden_size),
                              jnp.float32, -k, k)
    b_ih = jax.random.uniform(keys[2], (3 * hidden_size,), jnp.float32, -k, k)
    b_hh = jax.random.uniform(keys[3], (3 * hidden_size,), jnp.float32, -k, k)
    w_lin = jax.random.uniform(keys[4], (output_size, hidden_size),
                               jnp.float32, -k, k)
    b_lin = jax.random.uniform(keys[5], (output_size,), jnp.float32, -k, k)
    return w_ih, w_hh, b_ih, b_hh, w_lin, b_lin


def reference_forward(x, h0, w_ih, w_hh, b_ih, b_hh, w_lin, b_lin):
    """Pure-JAX reference (matches torch.nn.GRU single step + Linear)."""
    H = h0.shape[1]
    hp = jax.lax.Precision.HIGHEST
    gi = jnp.dot(x, w_ih.T, precision=hp) + b_ih
    gh = jnp.dot(h0, w_hh.T, precision=hp) + b_hh
    r = jax.nn.sigmoid(gi[:, 0:H] + gh[:, 0:H])
    z = jax.nn.sigmoid(gi[:, H:2 * H] + gh[:, H:2 * H])
    n = jnp.tanh(gi[:, 2 * H:3 * H] + r * gh[:, 2 * H:3 * H])
    h_new = (1.0 - z) * n + z * h0
    pred = jnp.dot(h_new, w_lin.T, precision=hp) + b_lin
    return h_new, pred


if __name__ == "__main__":
    INPUT_SIZE = 1
    HIDDEN = 64
    OUTPUT_SIZE = 1
    BATCH = 8

    key = jax.random.PRNGKey(0)
    k_x, k_p = jax.random.split(key)

    # input_seq: (B, input_size) -> viewed as (1, B, input_size) inside the model.
    x = jax.random.normal(k_x, (BATCH, INPUT_SIZE), jnp.float32)
    h0 = jnp.zeros((BATCH, HIDDEN), jnp.float32)   # nn.GRU default initial hidden

    w_ih, w_hh, b_ih, b_hh, w_lin, b_lin = init_params(
        k_p, INPUT_SIZE, HIDDEN, OUTPUT_SIZE)

    # One-time parameter re-layout (hoisted out of the per-call path).
    params = prepare_params(w_ih, w_hh, b_ih, b_hh, w_lin, b_lin)
    params = jax.block_until_ready(params)

    gru_out, predictions = gru_forward(x, h0, params)
    jax.block_until_ready((gru_out, predictions))

    ref_h, ref_pred = reference_forward(x, h0, w_ih, w_hh, b_ih, b_hh,
                                        w_lin, b_lin)
    assert gru_out.shape == (BATCH, HIDDEN)
    assert predictions.shape == (BATCH, OUTPUT_SIZE)
    assert jnp.allclose(gru_out, ref_h, atol=1e-5, rtol=1e-5)
    assert jnp.allclose(predictions, ref_pred, atol=1e-5, rtol=1e-5)

    print("KERNEL_OK")
</pallas_src>

<mosaic_0001>
module attributes {stable_mosaic.version = 11 : i64} {
  func.func @gru_cell_kernel(%arg0: memref<8x1xf32, #tpu.memory_space<vmem>>, %arg1: memref<8x64xf32, #tpu.memory_space<vmem>>, %arg2: memref<64x384xf32, #tpu.memory_space<vmem>>, %arg3: memref<8x64xf32, #tpu.memory_space<vmem>>, %arg4: memref<1x1xf32, #tpu.memory_space<smem>>, %arg5: memref<8x64xf32, #tpu.memory_space<vmem>>, %arg6: memref<8x1xf32, #tpu.memory_space<vmem>>) attributes {dimension_semantics = [], scalar_prefetch = 0 : i64, scratch_operands = 0 : i64, tpu.core_type = #tpu.core_type<tc>} {
    %c0 = arith.constant 0 : index
    %c0_0 = arith.constant 0 : index
    %0 = vector.load %arg0[%c0, %c0_0] : memref<8x1xf32, #tpu.memory_space<vmem>>, vector<8x1xf32>
    %c0_1 = arith.constant 0 : index
    %c0_2 = arith.constant 0 : index
    %1 = vector.load %arg1[%c0_1, %c0_2] : memref<8x64xf32, #tpu.memory_space<vmem>>, vector<8x64xf32>
    %c0_3 = arith.constant 0 : index
    %c0_4 = arith.constant 0 : index
    %2 = vector.load %arg3[%c0_3, %c0_4] : memref<8x64xf32, #tpu.memory_space<vmem>>, vector<8x64xf32>
    %3 = vector.extract_strided_slice %2 {offsets = [0, 0], sizes = [1, 64], strides = [1, 1]} : vector<8x64xf32> to vector<1x64xf32>
    %4 = vector.extract_strided_slice %2 {offsets = [1, 0], sizes = [1, 64], strides = [1, 1]} : vector<8x64xf32> to vector<1x64xf32>
    %5 = vector.extract_strided_slice %2 {offsets = [2, 0], sizes = [1, 64], strides = [1, 1]} : vector<8x64xf32> to vector<1x64xf32>
    %6 = vector.extract_strided_slice %2 {offsets = [3, 0], sizes = [1, 64], strides = [1, 1]} : vector<8x64xf32> to vector<1x64xf32>
    %7 = vector.extract_strided_slice %2 {offsets = [4, 0], sizes = [1, 64], strides = [1, 1]} : vector<8x64xf32> to vector<1x64xf32>
    %8 = vector.extract_strided_slice %2 {offsets = [5, 0], sizes = [1, 64], strides = [1, 1]} : vector<8x64xf32> to vector<1x64xf32>
    %9 = vector.extract_strided_slice %2 {offsets = [6, 0], sizes = [1, 64], strides = [1, 1]} : vector<8x64xf32> to vector<1x64xf32>
    %10 = vector.extract_strided_slice %2 {offsets = [7, 0], sizes = [1, 64], strides = [1, 1]} : vector<8x64xf32> to vector<1x64xf32>
    %11 = vector.broadcast %0 : vector<8x1xf32> to vector<8x64xf32>
    %12 = vector.broadcast %3 : vector<1x64xf32> to vector<8x64xf32>
    %13 = arith.mulf %11, %12 : vector<8x64xf32>
    %14 = vector.broadcast %0 : vector<8x1xf32> to vector<8x64xf32>
    %15 = vector.broadcast %4 : vector<1x64xf32> to vector<8x64xf32>
    %16 = arith.mulf %14, %15 : vector<8x64xf32>
    %17 = vector.broadcast %0 : vector<8x1xf32> to vector<8x64xf32>
    %18 = vector.broadcast %5 : vector<1x64xf32> to vector<8x64xf32>
    %19 = arith.mulf %17, %18 : vector<8x64xf32>
    %c0_5 = arith.constant 0 : index
    %c0_6 = arith.constant 0 : index
    %20 = vector.load %arg2[%c0_5, %c0_6] : memref<64x384xf32, #tpu.memory_space<vmem>>, vector<64x384xf32>
    %cst = arith.constant dense<0.000000e+00> : vector<8x384xf32>
    %21 = tpu.matmul %1, %20, %cst {dimension_numbers = #tpu.dot_dimension_numbers<[1], [0], [0], [1], [0, 0, 1, 1], [], []>} : vector<8x64xf32>, vector<64x384xf32>, vector<8x384xf32> -> vector<8x384xf32>
    %22 = vector.extract_strided_slice %21 {offsets = [0, 0], sizes = [8, 64], strides = [1, 1]} : vector<8x384xf32> to vector<8x64xf32>
    %23 = vector.extract_strided_slice %21 {offsets = [0, 128], sizes = [8, 64], strides = [1, 1]} : vector<8x384xf32> to vector<8x64xf32>
    %24 = vector.extract_strided_slice %21 {offsets = [0, 256], sizes = [8, 64], strides = [1, 1]} : vector<8x384xf32> to vector<8x64xf32>
    %25 = arith.addf %13, %22 : vector<8x64xf32>
    %26 = vector.broadcast %6 : vector<1x64xf32> to vector<8x64xf32>
    %27 = arith.addf %25, %26 : vector<8x64xf32>
    %28 = arith.negf %27 : vector<8x64xf32>
    %29 = math.exp %28 : vector<8x64xf32>
    %cst_7 = arith.constant 1.000000e+00 : f32
    %30 = vector.broadcast %cst_7 : f32 to vector<8x64xf32>
    %31 = arith.addf %30, %29 : vector<8x64xf32>
    %32 = arith.divf %30, %31 : vector<8x64xf32>
    %33 = arith.addf %16, %23 : vector<8x64xf32>
    %34 = vector.broadcast %7 : vector<1x64xf32> to vector<8x64xf32>
    %35 = arith.addf %33, %34 : vector<8x64xf32>
    %36 = arith.negf %35 : vector<8x64xf32>
    %37 = math.exp %36 : vector<8x64xf32>
    %cst_8 = arith.constant 1.000000e+00 : f32
    %38 = vector.broadcast %cst_8 : f32 to vector<8x64xf32>
    %39 = arith.addf %38, %37 : vector<8x64xf32>
    %40 = arith.divf %38, %39 : vector<8x64xf32>
    %41 = vector.broadcast %8 : vector<1x64xf32> to vector<8x64xf32>
    %42 = arith.addf %19, %41 : vector<8x64xf32>
    %43 = vector.broadcast %9 : vector<1x64xf32> to vector<8x64xf32>
    %44 = arith.addf %24, %43 : vector<8x64xf32>
    %45 = arith.mulf %32, %44 : vector<8x64xf32>
    %46 = arith.addf %42, %45 : vector<8x64xf32>
    %47 = math.tanh %46 : vector<8x64xf32>
    %cst_9 = arith.constant 1.000000e+00 : f32
    %48 = vector.broadcast %cst_9 : f32 to vector<8x64xf32>
    %49 = arith.subf %48, %40 : vector<8x64xf32>
    %50 = arith.mulf %49, %47 : vector<8x64xf32>
    %51 = arith.mulf %40, %1 : vector<8x64xf32>
    %52 = arith.addf %50, %51 : vector<8x64xf32>
    %c0_10 = arith.constant 0 : index
    %c0_11 = arith.constant 0 : index
    %53 = vector.load %arg5[%c0_10, %c0_11] : memref<8x64xf32, #tpu.memory_space<vmem>>, vector<8x64xf32>
    tpu.vector_store %arg5[%c0_10, %c0_11], %52 {strides = array<i32>} : memref<8x64xf32, #tpu.memory_space<vmem>>, vector<8x64xf32>,
    %54 = vector.broadcast %10 : vector<1x64xf32> to vector<8x64xf32>
    %55 = arith.mulf %52, %54 : vector<8x64xf32>
    %cst_12 = arith.constant dense<0.000000e+00> : vector<8xf32>
    %56 = vector.multi_reduction <add>, %55, %cst_12 [1] : vector<8x64xf32> to vector<8xf32>
    %57 = vector.shape_cast %56 : vector<8xf32> to vector<8x1xf32>
    %c0_13 = arith.constant 0 : index
    %c0_14 = arith.constant 0 : index
    %58 = memref.load %arg4[%c0_13, %c0_14] : memref<1x1xf32, #tpu.memory_space<smem>>
    %59 = vector.broadcast %58 : f32 to vector<8x1xf32>
    %60 = arith.addf %57, %59 : vector<8x1xf32>
    %c0_15 = arith.constant 0 : index
    %c0_16 = arith.constant 0 : index
    %61 = vector.load %arg6[%c0_15, %c0_16] : memref<8x1xf32, #tpu.memory_space<vmem>>, vector<8x1xf32>
    tpu.vector_store %arg6[%c0_15, %c0_16], %60 {strides = array<i32>} : memref<8x1xf32, #tpu.memory_space<vmem>>, vector<8x1xf32>,
    return
  }
}

</mosaic_0001>

<llo_original>
// kernel: _gru_forward.1
$region0: #{_gru_forward.1}
  #allocation0 [shape = 'u32[]', space=smem, size = 0x4, offset = 0x4, fixed_abs, tag = 'smem constant byte address 0x4 - core index']
  #allocation1 [shape = 'u32[144,128]{1,0:T(1,128)}', space=vmem, size = 0x12000, scoped, tag = 'internal scratch']
  #allocation2 [shape = 'f32[1,1]{1,0:T(1,128)S(6)}', space=smem, size = 0x200, scoped, tag = 'scoped memory for _gru_forward.1']
  %s0 = inlined_call_operand.vmem [shape: f32[8,1], index: 0, kind: input, shape index: {}]
  %s1 = inlined_call_operand.vmem [shape: f32[8,64], index: 1, kind: input, shape index: {}]
  %s2 = inlined_call_operand.hbm [shape: f32[64,384], index: 2, kind: input, shape index: {}]
  %s3 = inlined_call_operand.vmem [shape: f32[8,64], index: 3, kind: input, shape index: {}]
  %s4 = inlined_call_operand.<no memory space> [shape: f32[1,1], index: 4, kind: input, shape index: {}]
  %s5 = inlined_call_operand.hbm [shape: f32[8,64], index: 5, kind: output, shape index: {0}]
  %s6 = inlined_call_operand.vmem [shape: f32[8,1], index: 6, kind: output, shape index: {1}]
  %7 = xla_tuple %s5, %s6
  %s8 = sld [smem:[#allocation0]]
  $region42: #{_gru_forward.1} parent=0
    _
  %s10 = ssub.s32 1, %s8
  %s11 = scalar_select 0, %s10, %s8
  %12 = sst [smem:[#allocation2]] %s4
  $region1: #{_gru_forward.1} parent=0
    #allocation3 [shape = 'u8[98304]{0}', space=vmem, size = 0x18000, scoped, tag = 'input window, operand 2, single buffered']
    #allocation4 [shape = 's32[1]{0}', space=sflag, size = 0x4, scoped, tag = 'scoped memory for _gru_forward.1']
    #allocation5 [shape = 's32[1]{0}', space=sflag, size = 0x4, scoped, tag = 'scoped memory for _gru_forward.1']
    #allocation6 [shape = 'u8[4096]{0}', space=vmem, size = 0x1000, scoped, tag = 'output window, operand 0, single buffered']
    %13 = vsyncpa [#allocation4], 0
    %14 = vsyncpa [#allocation5], 0
    // Predicated region
    $region2: #{_gru_forward.1} parent=1 // pred_check
      _
    $region3: #{_gru_forward.1} parent=1 // pred_check_branch
      %16 = sbr.rel (0) target = $region5
    $region4: #{_gru_forward.1} parent=1 // pred_region
      _
    $region5: #{_gru_forward.1} parent=1 // pred_fallthru
      _
    // Predicated region
    $region6: #{_gru_forward.1} parent=1 // pred_check
      _
    $region7: #{_gru_forward.1} parent=1 // pred_check_branch
      %18 = sbr.rel (0) target = $region9
    $region8: #{_gru_forward.1} parent=1 // pred_region
      _
    $region9: #{_gru_forward.1} parent=1 // pred_fallthru
      _
    // Predicated region
    $region10: #{_gru_forward.1} parent=1 // pred_check
      _
    $region11: #{_gru_forward.1} parent=1 // pred_check_branch
      %20 = sbr.rel (0) target = $region13
    $region12: #{_gru_forward.1} parent=1 // pred_region
      %s22 = ssub.s32 3072, 3072
      %23 = vsyncadd [#allocation4], %s22
      %s24 = sshll.u32 [#allocation3], 4
      %s25 = int_to_ptr.vmem [resolvable:$true] %s24
      %30 = dma.hbm_to_vmem [thread:$0]  %s2, 3072, %s25, [#allocation4], 384, 384, 24
    $region13: #{_gru_forward.1} parent=1 // pred_fallthru
      _
    // Predicated region
    $region14: #{_gru_forward.1} parent=1 // pred_check
      _
    $region15: #{_gru_forward.1} parent=1 // pred_check_branch
      %32 = sbr.rel (0) target = $region17
    $region16: #{_gru_forward.1} parent=1 // pred_region
      _
    $region17: #{_gru_forward.1} parent=1 // pred_fallthru
      _
    // Predicated region
    $region18: #{_gru_forward.1} parent=1 // pred_check
      _
    $region19: #{_gru_forward.1} parent=1 // pred_check_branch
      %34 = sbr.rel (0) target = $region21
    $region20: #{_gru_forward.1} parent=1 // pred_region
      _
    $region21: #{_gru_forward.1} parent=1 // pred_fallthru
      _
    // Predicated region
    $region22: #{_gru_forward.1} parent=1 // pred_check
      _
    $region23: #{_gru_forward.1} parent=1 // pred_check_branch
      %36 = sbr.rel (0) target = $region25
    $region24: #{_gru_forward.1} parent=1 // pred_region
      %37 = dma.done [#allocation4], 3072
    $region25: #{_gru_forward.1} parent=1 // pred_fallthru
      _
    %v38 = vld [vmem:[%s0] sm:$0xff]
    %v39 = vld [vmem:[%s1] sm:$0xff]
    %v40 = vld [vmem:[%s3] sm:$0xff]
    %42 = vset.pattern.permute.xlu0 0
    %43 = vperm.xlu0 %42, %v38
    %v44 = vpop.permute.xlu0 %43
    %v46 = vlaneseq
    %v47 = vshrl.u32 %v46, 7
    %v48 = vsub.s32 0, %v47
    %v49 = vrot.slane %v40, %v48
    %v50 = vmul.f32 %v44, %v49
    %v51 = vlaneseq
    %v52 = vshrl.u32 %v51, 7
    %v53 = vsub.s32 1, %v52
    %v54 = vrot.slane %v40, %v53
    %v55 = vmul.f32 %v44, %v54
    %v56 = vlaneseq
    %v57 = vshrl.u32 %v56, 7
    %v58 = vsub.s32 2, %v57
    %v59 = vrot.slane %v40, %v58
    %v60 = vmul.f32 %v44, %v59
    %v61 = vld [vmem:[#allocation3] sm:$0xff]
    %v62 = vld [vmem:[#allocation3 + $0x8] sm:$0xff]
    %v63 = vld [vmem:[#allocation3 + $0x10] sm:$0xff]
    %v64 = vld [vmem:[#allocation3 + $0x18] sm:$0xff]
    %v65 = vld [vmem:[#allocation3 + $0x20] sm:$0xff]
    %v66 = vld [vmem:[#allocation3 + $0x28] sm:$0xff]
    %v67 = vld [vmem:[#allocation3 + $0x30] sm:$0xff]
    %v68 = vld [vmem:[#allocation3 + $0x38] sm:$0xff]
    %v69 = vld [vmem:[#allocation3 + $0x40] sm:$0xff]
    %v70 = vld [vmem:[#allocation3 + $0x48] sm:$0xff]
    %v71 = vld [vmem:[#allocation3 + $0x50] sm:$0xff]
    %v72 = vld [vmem:[#allocation3 + $0x58] sm:$0xff]
    %v73 = vld [vmem:[#allocation3 + $0x60] sm:$0xff]
    %v74 = vld [vmem:[#allocation3 + $0x68] sm:$0xff]
    %v75 = vld [vmem:[#allocation3 + $0x70] sm:$0xff]
    %v76 = vld [vmem:[#allocation3 + $0x78] sm:$0xff]
    %v77 = vld [vmem:[#allocation3 + $0x80] sm:$0xff]
    %v78 = vld [vmem:[#allocation3 + $0x88] sm:$0xff]
    %v79 = vld [vmem:[#allocation3 + $0x90] sm:$0xff]
    %v80 = vld [vmem:[#allocation3 + $0x98] sm:$0xff]
    %v81 = vld [vmem:[#allocation3 + $0xa0] sm:$0xff]
    %v82 = vld [vmem:[#allocation3 + $0xa8] sm:$0xff]
    %v83 = vld [vmem:[#allocation3 + $0xb0] sm:$0xff]
    %v84 = vld [vmem:[#allocation3 + $0xb8] sm:$0xff]
    %vm85 = vcmask 523264
    %v87 = vsel %vm85, %v39, 0
    %89 = vmatprep.subr.mxu0 0.0
    %90 = vmatpush1.msra.mxu0 0.0
    %91 = vmatprep.subr.mxu0 0.0
    %92 = vmatpush1.msra.mxu0 0.0
    %93 = vmatprep.subr.mxu0 0.0
    %94 = vmatpush1.msra.mxu0 0.0
    %95 = vmatprep.subr.mxu0 0.0
    %96 = vmatpush1.msra.mxu0 0.0
    %97 = vmatprep.subr.mxu0 0.0
    %98 = vmatpush1.msra.mxu0 0.0
    %99 = vmatprep.subr.mxu0 0.0
    %100 = vmatpush1.msra.mxu0 0.0
    %101 = vmatprep.subr.mxu0 0.0
    %102 = vmatpush1.msra.mxu0 0.0
    %103 = vmatprep.subr.mxu0 0.0
    %104 = vmatpush1.msra.mxu0 0.0
    %105 = vmatprep.subr.mxu0 %v83
    %106 = vmatpush1.msra.mxu0 %v82
    %107 = vmatprep.subr.mxu0 %v80
    %108 = vmatpush1.msra.mxu0 %v79
    %109 = vmatprep.subr.mxu0 %v77
    %110 = vmatpush1.msra.mxu0 %v76
    %111 = vmatprep.subr.mxu0 %v74
    %112 = vmatpush1.msra.mxu0 %v73
    %113 = vmatprep.subr.mxu0 %v71
    %114 = vmatpush1.msra.mxu0 %v70
    %115 = vmatprep.subr.mxu0 %v68
    %116 = vmatpush1.msra.mxu0 %v67
    %117 = vmatprep.subr.mxu0 %v65
    %118 = vmatpush1.msra.mxu0 %v64
    %119 = vmatprep.subr.mxu0 %v62
    %120 = vmatpush1.msra.mxu0 %v61
    %121 = vmatprep.subr.mxu0 0.0
    %122 = vmatpush2.msra.mxu0 0.0
    %123 = vmatprep.subr.mxu0 0.0
    %124 = vmatpush2.msra.mxu0 0.0
    %125 = vmatprep.subr.mxu0 0.0
    %126 = vmatpush2.msra.mxu0 0.0
    %127 = vmatprep.subr.mxu0 0.0
    %128 = vmatpush2.msra.mxu0 0.0
    %129 = vmatprep.subr.mxu0 0.0
    %130 = vmatpush2.msra.mxu0 0.0
    %131 = vmatprep.subr.mxu0 0.0
    %132 = vmatpush2.msra.mxu0 0.0
    %133 = vmatprep.subr.mxu0 0.0
    %134 = vmatpush2.msra.mxu0 0.0
    %135 = vmatprep.subr.mxu0 0.0
    %136 = vmatpush2.msra.mxu0 0.0
    %137 = vmatprep.subr.mxu0 0.0
    %138 = vmatpush2.msra.mxu0 0.0
    %139 = vmatprep.subr.mxu0 0.0
    %140 = vmatpush2.msra.mxu0 0.0
    %141 = vmatprep.subr.mxu0 0.0
    %142 = vmatpush2.msra.mxu0 0.0
    %143 = vmatprep.subr.mxu0 0.0
    %144 = vmatpush2.msra.mxu0 0.0
    %145 = vmatprep.subr.mxu0 0.0
    %146 = vmatpush2.msra.mxu0 0.0
    %147 = vmatprep.subr.mxu0 0.0
    %148 = vmatpush2.msra.mxu0 0.0
    %149 = vmatprep.subr.mxu0 0.0
    %150 = vmatpush2.msra.mxu0 0.0
    %151 = vmatprep.subr.mxu0 0.0
    %152 = vmatpush2.msra.mxu0 0.0
    %153 = vmatprep.mubr.f32.mxu0 0.0
    %154 = vmatmul.mubr.f32.gmra.mxu0 %v87
    %v155 = vpop.f32.mrf.mxu0
    %v156 = vadd.f32 0.0, %v155
    %v157 = vpop.f32.mrf.mxu0
    %v158 = vadd.f32 0.0, %v157
    %159 = vdwg.mxu0
    %160 = vmatprep.subr.mxu0 0.0
    %161 = vmatpush1.msra.mxu0 0.0
    %162 = vmatprep.subr.mxu0 0.0
    %163 = vmatpush1.msra.mxu0 0.0
    %164 = vmatprep.subr.mxu0 0.0
    %165 = vmatpush1.msra.mxu0 0.0
    %166 = vmatprep.subr.mxu0 0.0
    %167 = vmatpush1.msra.mxu0 0.0
    %168 = vmatprep.subr.mxu0 0.0
    %169 = vmatpush1.msra.mxu0 0.0
    %170 = vmatprep.subr.mxu0 0.0
    %171 = vmatpush1.msra.mxu0 0.0
    %172 = vmatprep.subr.mxu0 0.0
    %173 = vmatpush1.msra.mxu0 0.0
    %174 = vmatprep.subr.mxu0 0.0
    %175 = vmatpush1.msra.mxu0 0.0
    %176 = vmatprep.subr.mxu0 0.0
    %177 = vmatpush1.msra.mxu0 %v84
    %178 = vmatprep.subr.mxu0 0.0
    %179 = vmatpush1.msra.mxu0 %v81
    %180 = vmatprep.subr.mxu0 0.0
    %181 = vmatpush1.msra.mxu0 %v78
    %182 = vmatprep.subr.mxu0 0.0
    %183 = vmatpush1.msra.mxu0 %v75
    %184 = vmatprep.subr.mxu0 0.0
    %185 = vmatpush1.msra.mxu0 %v72
    %186 = vmatprep.subr.mxu0 0.0
    %187 = vmatpush1.msra.mxu0 %v69
    %188 = vmatprep.subr.mxu0 0.0
    %189 = vmatpush1.msra.mxu0 %v66
    %190 = vmatprep.subr.mxu0 0.0
    %191 = vmatpush1.msra.mxu0 %v63
    %192 = vmatprep.subr.mxu0 0.0
    %193 = vmatpush2.msra.mxu0 0.0
    %194 = vmatprep.subr.mxu0 0.0
    %195 = vmatpush2.msra.mxu0 0.0
    %196 = vmatprep.subr.mxu0 0.0
    %197 = vmatpush2.msra.mxu0 0.0
    %198 = vmatprep.subr.mxu0 0.0
    %199 = vmatpush2.msra.mxu0 0.0
    %200 = vmatprep.subr.mxu0 0.0
    %201 = vmatpush2.msra.mxu0 0.0
    %202 = vmatprep.subr.mxu0 0.0
    %203 = vmatpush2.msra.mxu0 0.0
    %204 = vmatprep.subr.mxu0 0.0
    %205 = vmatpush2.msra.mxu0 0.0
    %206 = vmatprep.subr.mxu0 0.0
    %207 = vmatpush2.msra.mxu0 0.0
    %208 = vmatprep.subr.mxu0 0.0
    %209 = vmatpush2.msra.mxu0 0.0
    %210 = vmatprep.subr.mxu0 0.0
    %211 = vmatpush2.msra.mxu0 0.0
    %212 = vmatprep.subr.mxu0 0.0
    %213 = vmatpush2.msra.mxu0 0.0
    %214 = vmatprep.subr.mxu0 0.0
    %215 = vmatpush2.msra.mxu0 0.0
    %216 = vmatprep.subr.mxu0 0.0
    %217 = vmatpush2.msra.mxu0 0.0
    %218 = vmatprep.subr.mxu0 0.0
    %219 = vmatpush2.msra.mxu0 0.0
    %220 = vmatprep.subr.mxu0 0.0
    %221 = vmatpush2.msra.mxu0 0.0
    %222 = vmatprep.subr.mxu0 0.0
    %223 = vmatpush2.msra.mxu0 0.0
    %224 = vmatprep.mubr.f32.mxu0 0.0
    %225 = vmatmul.mubr.f32.gmra.mxu0 %v87
    %v226 = vpop.f32.mrf.mxu0
    %v227 = vadd.f32 0.0, %v226
    %v228 = vpop.f32.mrf.mxu0
    %229 = vdwg.mxu0
    %v230 = vadd.f32 %v50, %v156
    %v231 = vlaneseq
    %v232 = vshrl.u32 %v231, 7
    %v233 = vsub.s32 3, %v232
    %v234 = vrot.slane %v40, %v233
    %v235 = vadd.f32 %v230, %v234
    %v236 = vxor.u32 %v235, 2147483648
    %v237 = vmul.f32 %v236, 1.442695
    %v238 = vpow.pop %v237
    %v239 = vadd.f32 %v238, 1.0
    %v240 = vrcp.pop %v239
    %v241 = vmul.f32 1.0, %v240
    %v242 = vadd.f32 %v55, %v158
    %v243 = vlaneseq
    %v244 = vshrl.u32 %v243, 7
    %v245 = vsub.s32 4, %v244
    %v246 = vrot.slane %v40, %v245
    %v247 = vadd.f32 %v242, %v246
    %v248 = vxor.u32 %v247, 2147483648
    %v249 = vmul.f32 %v248, 1.442695
    %v250 = vpow.pop %v249
    %v251 = vadd.f32 %v250, 1.0
    %v252 = vrcp.pop %v251
    %v253 = vmul.f32 1.0, %v252
    %v254 = vlaneseq
    %v255 = vshrl.u32 %v254, 7
    %v256 = vsub.s32 5, %v255
    %v257 = vrot.slane %v40, %v256
    %v258 = vadd.f32 %v60, %v257
    %v259 = vlaneseq
    %v260 = vshrl.u32 %v259, 7
    %v261 = vsub.s32 6, %v260
    %v262 = vrot.slane %v40, %v261
    %v263 = vadd.f32 %v227, %v262
    %v264 = vmul.f32 %v241, %v263
    %v265 = vadd.f32 %v258, %v264
    %v266 = vtanh.pop %v265
    %v267 = vsub.f32 1.0, %v253
    %v268 = vmul.f32 %v267, %v266
    %v269 = vmul.f32 %v253, %v39
    %v270 = vadd.f32 %v268, %v269
    %271 = vst.msk [vmem:[#allocation6] sm:$0xff] %vm85, %v270
    %v272 = vlaneseq
    %v273 = vshrl.u32 %v272, 7
    %v274 = vsub.s32 7, %v273
    %v275 = vrot.slane %v40, %v274
    %v276 = vmul.f32 %v270, %v275
    %v277 = vsel %vm85, %v276, 0.0
    %278 = vadd.xlane.f32.xlu0 %v277
    %v279 = vpop.xlane.xlu0 %278
    %s280 = sld [smem:[#allocation2]]
    %v281 = vstv %s280
    %v282 = vadd.f32 %v279, %v281
    %vm283 = vcmask 7168
    %284 = vst.msk [vmem:[%s6] sm:$0xff] %vm283, %v282
    // Predicated region
    $region26: #{_gru_forward.1} parent=1 // pred_check
      _
    $region27: #{_gru_forward.1} parent=1 // pred_check_branch
      %286 = sbr.rel (0) target = $region29
    $region28: #{_gru_forward.1} parent=1 // pred_region
      %s288 = ssub.s32 128, 128
      %289 = vsyncadd [#allocation5], %s288
      %s291 = sshll.u32 [#allocation6], 4
      %s292 = int_to_ptr.vmem [resolvable:$true] %s291
      %294 = dma.vmem_to_hbm [thread:$0]  %s292, 128, %s5, [#allocation5]
    $region29: #{_gru_forward.1} parent=1 // pred_fallthru
      _
    // Predicated region
    $region30: #{_gru_forward.1} parent=1 // pred_check
      _
    $region31: #{_gru_forward.1} parent=1 // pred_check_branch
      %296 = sbr.rel (0) target = $region33
    $region32: #{_gru_forward.1} parent=1 // pred_region
      _
    $region33: #{_gru_forward.1} parent=1 // pred_fallthru
      _
    // Predicated region
    $region34: #{_gru_forward.1} parent=1 // pred_check
      _
    $region35: #{_gru_forward.1} parent=1 // pred_check_branch
      %298 = sbr.rel (0) target = $region37
    $region36: #{_gru_forward.1} parent=1 // pred_region
      %299 = dma.done [#allocation5], 128
    $region37: #{_gru_forward.1} parent=1 // pred_fallthru
      _
    // Predicated region
    $region38: #{_gru_forward.1} parent=1 // pred_check
      _
    $region39: #{_gru_forward.1} parent=1 // pred_check_branch
      %301 = sbr.rel (0) target = $region41
    $region40: #{_gru_forward.1} parent=1 // pred_region
      _
    $region41: #{_gru_forward.1} parent=1 // pred_fallthru
      _
    %302 = vsyncpa [#allocation4], 1
    %303 = vsyncpa [#allocation5], 1

</llo_original>
